<compile_context>
chip_gen: v6e
topology: v6e:2x2x1
jax: 0.10.0
libtpu: 0.0.40
codegen_flags: <defaults>
</compile_context>

<pallas_src>
import functools
from collections import namedtuple

import jax
import jax.numpy as jnp
from jax.experimental import pallas as pl
from jax.experimental.pallas import tpu as pltpu


_LANE = 128
_DEFAULT_MAX_ROWS_PER_TILE = 4096      # 4096 * 128 * 4B = 2 MiB per f32 block
_TARGET_BLOCK_BYTES = 2 * 1024 * 1024  # ~2 MiB blocks amortize ~0.35us/step overhead
_MIN_BLOCK_BYTES = 256 * 1024          # don't shrink blocks below this for megacore
_GATHER_SLOTS = 3                      # manual DMA gather: 3 slots -> 2 copies ahead

BankPlan = namedtuple("BankPlan", "n c h w d d_pad rows r_tile num_tiles")


# ----------------------------------------------------------------------------
# Layout planning / packing
# ----------------------------------------------------------------------------
def _tile_plan(d, max_rows_per_tile):
    """Lane-dense tiling plan for a flattened image of `d` elements.

    Layout is (rows, 128) with rows * 128 == d_pad >= d.  r_tile is either the
    full `rows` (single tile per image) or a multiple of 8 dividing `rows`.
    """
    rows = -(-d // _LANE)                           # ceil-div
    if rows <= max_rows_per_tile:
        r_tile, num_tiles = rows, 1
    else:
        r_tile = max(8, (max_rows_per_tile // 8) * 8)   # sublane-aligned
        num_tiles = -(-rows // r_tile)
        rows = num_tiles * r_tile                   # pad so every block is full
    return rows * _LANE, rows, r_tile, num_tiles


def pack_bank(images, *, max_rows_per_tile=_DEFAULT_MAX_ROWS_PER_TILE,
              stream_dtype=None):
    """One-time repack of the (n,C,H,W) bank into lane-dense (n, rows, 128)."""
    n, c, h, w = images.shape
    d = c * h * w
    d_pad, rows, r_tile, num_tiles = _tile_plan(d, max_rows_per_tile)
    flat = images.reshape(n, d)
    if stream_dtype is not None and flat.dtype != jnp.dtype(stream_dtype):
        flat = flat.astype(stream_dtype)
    if d_pad != d:
        flat = jnp.pad(flat, ((0, 0), (0, d_pad - d)))
    bank = flat.reshape(n, rows, _LANE)
    return bank, BankPlan(n, c, h, w, d, d_pad, rows, r_tile, num_tiles)


# ----------------------------------------------------------------------------
# Kernels
# ----------------------------------------------------------------------------
def _tanh_kernel(img_ref, o_ref):
    # tanh in f32 (EUP); cast only on store so bf16 streaming also works on v5e.
    o_ref[...] = jnp.tanh(img_ref[...].astype(jnp.float32)).astype(o_ref.dtype)


def _gather_tanh_kernel(idx_ref, img_ref, o_ref):
    # Large-image gather: the SMEM index vector is consumed by the input
    # index_map; the body only applies tanh to the gathered tile.
    del idx_ref
    o_ref[...] = jnp.tanh(img_ref[...].astype(jnp.float32)).astype(o_ref.dtype)


def _gather_tanh_dma_kernel(idx_ref, bank_ref, o_ref, buf, sems, *,
                            b_tile, n_slots):
    """Manual multi-image DMA gather: b_tile gathered images per grid step.

    bank_ref lives in HBM (pl.ANY); buf is a (n_slots, rows, 128) VMEM ring
    with up to n_slots-1 copies in flight.  Each step is self-contained, so
    the grid axis can be 'parallel' (megacore-safe).
    """
    g = pl.program_id(0)
    lookahead = n_slots - 1

    def issue(j):                       # j is a static Python int
        slot = j % n_slots
        img = idx_ref[g * b_tile + j]   # dynamic scalar from SMEM
        pltpu.make_async_copy(bank_ref.at[img], buf.at[slot],
                              sems.at[slot]).start()

    for j in range(min(lookahead, b_tile)):     # prime the pipeline
        issue(j)

    for j in range(b_tile):
        slot = j % n_slots
        pltpu.make_async_copy(bank_ref.at[0], buf.at[slot],
                              sems.at[slot]).wait()
        o_ref[j, :, :] = jnp.tanh(buf[slot].astype(jnp.float32)).astype(o_ref.dtype)
        if j + lookahead < b_tile:
            issue(j + lookahead)


# ----------------------------------------------------------------------------
# Wrappers
# ----------------------------------------------------------------------------
def _cost(num_images, plan, itemsize):
    return pl.CostEstimate(flops=0,
                           transcendentals=num_images * plan.d_pad,
                           bytes_accessed=2 * num_images * plan.d_pad * itemsize)


def _batch_tile(b, img_bytes, override):
    """Images per block: ~2 MiB blocks, but keep >=4 grid steps for megacore
    whenever that doesn't push blocks below ~256 KiB."""
    if override is not None:
        return max(1, min(int(override), b))
    bt = max(1, min(b, _TARGET_BLOCK_BYTES // img_bytes))
    quarter = -(-b // 4)
    if quarter * img_bytes >= _MIN_BLOCK_BYTES:
        bt = max(1, min(bt, quarter))
    return bt


def _forward_identity(bank, plan, out_dtype, batch_tile):
    n, rows, r_tile, num_tiles = plan.n, plan.rows, plan.r_tile, plan.num_tiles
    itemsize = jnp.dtype(bank.dtype).itemsize
    cost = _cost(n, plan, itemsize)

    if num_tiles == 1:
        # Small images: many images per block (amortize per-step overhead).
        b_tile = _batch_tile(n, rows * _LANE * itemsize, batch_tile)
        return pl.pallas_call(
            _tanh_kernel,
            out_shape=jax.ShapeDtypeStruct((n, rows, _LANE), out_dtype),
            grid_spec=pltpu.PrefetchScalarGridSpec(
                num_scalar_prefetch=0,
                grid=(pl.cdiv(n, b_tile),),
                in_specs=[pl.BlockSpec((b_tile, rows, _LANE),
                                       lambda i: (i, 0, 0))],
                out_specs=pl.BlockSpec((b_tile, rows, _LANE),
                                       lambda i: (i, 0, 0))),
            compiler_params=pltpu.CompilerParams(
                dimension_semantics=("parallel",)),
            cost_estimate=cost,
        )(bank)

    # Large images: 2 MiB tiles within each image.
    return pl.pallas_call(
        _tanh_kernel,
        out_shape=jax.ShapeDtypeStruct((n, rows, _LANE), out_dtype),
        grid_spec=pltpu.PrefetchScalarGridSpec(
            num_scalar_prefetch=0,
            grid=(n, num_tiles),
            in_specs=[pl.BlockSpec((1, r_tile, _LANE), lambda i, t: (i, t, 0))],
            out_specs=pl.BlockSpec((1, r_tile, _LANE), lambda i, t: (i, t, 0))),
        compiler_params=pltpu.CompilerParams(
            dimension_semantics=("parallel", "parallel")),
        cost_estimate=cost,
    )(bank)


def _forward_gather(bank, plan, indices, out_dtype, batch_tile):
    b = int(indices.shape[0])
    rows, r_tile, num_tiles = plan.rows, plan.r_tile, plan.num_tiles
    itemsize = jnp.dtype(bank.dtype).itemsize
    cost = _cost(b, plan, itemsize)
    idx = indices.astype(jnp.int32)

    if num_tiles > 1:
        # Large images: per-(image, tile) BlockSpec gather; blocks are already
        # ~2 MiB so the per-step overhead is well amortized.
        return pl.pallas_call(
            _gather_tanh_kernel,
            out_shape=jax.ShapeDtypeStruct((b, rows, _LANE), out_dtype),
            grid_spec=pltpu.PrefetchScalarGridSpec(
                num_scalar_prefetch=1,
                grid=(b, num_tiles),
                in_specs=[pl.BlockSpec((1, r_tile, _LANE),
                                       lambda i, t, idx_r: (idx_r[i], t, 0))],
                out_specs=pl.BlockSpec((1, r_tile, _LANE),
                                       lambda i, t, idx_r: (i, t, 0))),
            compiler_params=pltpu.CompilerParams(
                dimension_semantics=("parallel", "parallel")),
            cost_estimate=cost,
        )(idx, bank)

    # Small images: manual multi-image DMA gather (b_tile images per step).
    img_bytes = rows * _LANE * itemsize
    b_tile = _batch_tile(b, img_bytes, batch_tile)
    if batch_tile is None:
        b_tile = min(b_tile, 32)            # bound per-step unrolled DMA count
    num_steps = pl.cdiv(b, b_tile)
    pad = num_steps * b_tile - b
    if pad:                                  # pad indices (index 0 is always valid);
        idx = jnp.concatenate([idx, jnp.zeros((pad,), jnp.int32)])  # OOB rows dropped
    n_slots = min(_GATHER_SLOTS, b_tile + 1)
    kernel = functools.partial(_gather_tanh_dma_kernel,
                               b_tile=b_tile, n_slots=n_slots)
    return pl.pallas_call(
        kernel,
        out_shape=jax.ShapeDtypeStruct((b, rows, _LANE), out_dtype),
        grid_spec=pltpu.PrefetchScalarGridSpec(
            num_scalar_prefetch=1,
            grid=(num_steps,),
            in_specs=[pl.BlockSpec(memory_space=pl.ANY)],
            out_specs=pl.BlockSpec((b_tile, rows, _LANE),
                                   lambda g, idx_r: (g, 0, 0)),
            scratch_shapes=[pltpu.VMEM((n_slots, rows, _LANE), bank.dtype),
                            pltpu.SemaphoreType.DMA((n_slots,))]),
        compiler_params=pltpu.CompilerParams(
            dimension_semantics=("parallel",)),
        cost_estimate=cost,
    )(idx, bank)


def _unpack(out, plan, b):
    flat = out.reshape(b, plan.d_pad)
    if plan.d_pad != plan.d:
        # TODO(synk): consumers could accept the padded lane-dense layout and
        # skip this extra crop pass.
        flat = flat[:, :plan.d]
    return flat.reshape(b, plan.c, plan.h, plan.w)


def generator_forward_packed(bank, plan, indices=None, *, out_dtype=None,
                             batch_tile=None):
    out_dtype = bank.dtype if out_dtype is None else out_dtype
    if indices is None:
        out = _forward_identity(bank, plan, out_dtype, batch_tile)
        b = plan.n
    else:
        out = _forward_gather(bank, plan, indices, out_dtype, batch_tile)
        b = int(indices.shape[0])
    return _unpack(out, plan, b)


def generator_forward(images, indices=None, *,
                      max_rows_per_tile=_DEFAULT_MAX_ROWS_PER_TILE,
                      stream_dtype=None, batch_tile=None):
    """tanh(images[indices]) (or tanh(images) if indices is None) via Pallas."""
    bank, plan = pack_bank(images, max_rows_per_tile=max_rows_per_tile,
                           stream_dtype=stream_dtype)
    return generator_forward_packed(bank, plan, indices, batch_tile=batch_tile)


# ----------------------------------------------------------------------------
# hash_vectors stand-in (external symbol in the original repo)
# ----------------------------------------------------------------------------
def hash_vectors(x, n):
    # TODO(synk): `hash_vectors` is an external helper not defined in the
    # provided module; deterministic stand-in (quantize, sum, mod n).
    q = jnp.floor(x * 1024.0).astype(jnp.int32)
    return (jnp.abs(jnp.sum(q, axis=-1)) % n).astype(jnp.int32)


# ----------------------------------------------------------------------------
# Generator module (parameter setup in plain JAX, hot path in Pallas)
# ----------------------------------------------------------------------------
class Generator:
    def __init__(self, z_dim, output_dim, n=64, init_mode='noise', channels=3,
                 key=None, stream_dtype=None,
                 max_rows_per_tile=_DEFAULT_MAX_ROWS_PER_TILE):
        self.n = int(n)
        shape = (self.n, channels, output_dim, output_dim)
        if init_mode == 'noise':
            images = jax.random.normal(key, shape, dtype=jnp.float32) * 0.5
        elif init_mode == 'ones':
            images = jnp.ones(shape, dtype=jnp.float32)
        elif init_mode == 'zeros':
            # NB: matches the original PyTorch code, which (buggily) uses ones.
            images = jnp.ones(shape, dtype=jnp.float32)
        else:
            raise ValueError('Bad init mode')
        self.images = images
        # One-time lane-dense repack (pad hoisted out of the forward path).
        self._bank, self._plan = pack_bank(
            images, max_rows_per_tile=max_rows_per_tile,
            stream_dtype=stream_dtype)

    def __call__(self, x):
        b = x.shape[0]
        if b != self.n:
            idx = hash_vectors(x, n=self.n)
            return generator_forward_packed(self._bank, self._plan, idx)
        return generator_forward_packed(self._bank, self._plan, None)


# ----------------------------------------------------------------------------
# Smoke test
# ----------------------------------------------------------------------------
if __name__ == "__main__":
    key = jax.random.PRNGKey(0)
    k_img, k_in1, k_in2, k_img2, k_img3, k_img4 = jax.random.split(key, 6)

    z_dim, output_dim, n, channels = 32, 16, 8, 3
    gen = Generator(z_dim, output_dim, n=n, init_mode='noise',
                    channels=channels, key=k_img)

    # Case 1: batch == n -> identity path, batched (b_tile) blocks
    x_full = jax.random.normal(k_in1, (n, z_dim), dtype=jnp.float32)
    out_full = jax.block_until_ready(gen(x_full))
    assert out_full.shape == (n, channels, output_dim, output_dim)
    assert jnp.allclose(out_full, jnp.tanh(gen.images), atol=1e-5)

    # Case 2: batch != n -> manual multi-image DMA gather path
    b = 4
    x_small = jax.random.normal(k_in2, (b, z_dim), dtype=jnp.float32)
    idx_ref = hash_vectors(x_small, n=n)
    out_small = jax.block_until_ready(gen(x_small))
    assert out_small.shape == (b, channels, output_dim, output_dim)
    assert jnp.allclose(out_small, jnp.tanh(gen.images[idx_ref]), atol=1e-5)

    # Case 3: force the multi-tile (large-image) paths at small shapes
    imgs3 = jax.random.normal(k_img2, (4, 3, 32, 32), dtype=jnp.float32)  # rows=24
    idx3 = jnp.array([3, 0, 2, 0, 1], dtype=jnp.int32)
    out3 = jax.block_until_ready(
        generator_forward(imgs3, idx3, max_rows_per_tile=8))              # 3 tiles
    assert jnp.allclose(out3, jnp.tanh(imgs3[idx3]), atol=1e-5)
    out3i = jax.block_until_ready(
        generator_forward(imgs3, None, max_rows_per_tile=8))
    assert jnp.allclose(out3i, jnp.tanh(imgs3), atol=1e-5)

    # Case 4: flattened size not a multiple of 128 -> padded lane layout
    imgs4 = jax.random.normal(k_img3, (5, 1, 10, 10), dtype=jnp.float32)  # d=100
    idx4 = jnp.array([4, 4, 1], dtype=jnp.int32)
    out4 = jax.block_until_ready(generator_forward(imgs4, idx4))
    assert jnp.allclose(out4, jnp.tanh(imgs4[idx4]), atol=1e-5)

    # Case 5: partial last block on both batched paths (batch_tile override)
    idx5 = jnp.array([0, 3, 3, 1, 2, 0, 1], dtype=jnp.int32)              # len 7
    out5 = jax.block_until_ready(generator_forward(imgs3, idx5, batch_tile=3))
    assert jnp.allclose(out5, jnp.tanh(imgs3[idx5]), atol=1e-5)
    out5i = jax.block_until_ready(generator_forward(imgs3, None, batch_tile=3))
    assert jnp.allclose(out5i, jnp.tanh(imgs3), atol=1e-5)

    # Case 6: bf16 streaming (feedback #6) on the DMA gather path
    imgs6 = jax.random.normal(k_img4, (6, 4, 32, 32), dtype=jnp.float32)  # rows=32
    idx6 = jnp.array([5, 0, 2, 2, 4], dtype=jnp.int32)
    out6 = jax.block_until_ready(
        generator_forward(imgs6, idx6, stream_dtype=jnp.bfloat16))
    assert out6.dtype == jnp.bfloat16
    assert jnp.allclose(out6.astype(jnp.float32), jnp.tanh(imgs6[idx6]), atol=2e-2)

    print("KERNEL_OK")
</pallas_src>

<mosaic_0001>
module attributes {stable_mosaic.version = 11 : i64} {
  func.func @_tanh_kernel(%arg0: i32, %arg1: memref<8x6x128xf32, #tpu.memory_space<vmem>>, %arg2: memref<8x6x128xf32, #tpu.memory_space<vmem>>) attributes {dimension_semantics = [#tpu.dimension_semantics<parallel>], iteration_bounds = array<i64: 1>, scalar_prefetch = 0 : i64, scratch_operands = 0 : i64, tpu.core_type = #tpu.core_type<tc>, window_params = [{transform_indices = @transform_0, window_bounds = array<i64: 8, 6, 128>}, {transform_indices = @transform_1, window_bounds = array<i64: 8, 6, 128>}]} {
    %c0 = arith.constant 0 : index
    %c0_0 = arith.constant 0 : index
    %c0_1 = arith.constant 0 : index
    %0 = vector.load %arg1[%c0, %c0_0, %c0_1] : memref<8x6x128xf32, #tpu.memory_space<vmem>>, vector<8x6x128xf32>
    %1 = math.tanh %0 : vector<8x6x128xf32>
    %c0_2 = arith.constant 0 : index
    %c0_3 = arith.constant 0 : index
    %c0_4 = arith.constant 0 : index
    %2 = vector.load %arg2[%c0_2, %c0_3, %c0_4] : memref<8x6x128xf32, #tpu.memory_space<vmem>>, vector<8x6x128xf32>
    tpu.vector_store %arg2[%c0_2, %c0_3, %c0_4], %1 {strides = array<i32>} : memref<8x6x128xf32, #tpu.memory_space<vmem>>, vector<8x6x128xf32>,
    return
  }
  func.func @transform_0(%arg0: i32) -> (i32, i32, i32) {
    %c0_i32 = arith.constant 0 : i32
    %c0_i32_0 = arith.constant 0 : i32
    %c0_i32_1 = arith.constant 0 : i32
    return %arg0, %c0_i32, %c0_i32_0 : i32, i32, i32
  }
  func.func @transform_1(%arg0: i32) -> (i32, i32, i32) {
    %c0_i32 = arith.constant 0 : i32
    %c0_i32_0 = arith.constant 0 : i32
    %c0_i32_1 = arith.constant 0 : i32
    return %arg0, %c0_i32, %c0_i32_0 : i32, i32, i32
  }
}

</mosaic_0001>

<llo_original>
// kernel: tpu_custom_call.1
$region0: #{tpu_custom_call.1}
  #allocation0 [shape = 'u32[]', space=smem, size = 0x4, offset = 0x4, fixed_abs, tag = 'smem constant byte address 0x4 - core index']
  #allocation1 [shape = 'u32[144,128]{1,0:T(1,128)}', space=vmem, size = 0x12000, scoped, tag = 'internal scratch']
  %s0 = inlined_call_operand.vmem [shape: f32[8,6,128], index: 0, kind: input, shape index: {}]
  %s1 = inlined_call_operand.vmem [shape: f32[8,6,128], index: 1, kind: output, shape index: {}]
  %s2 = sld [smem:[#allocation0]]
  $region14: #{tpu_custom_call.1} parent=0
    _
  %s4 = ssub.s32 1, %s2
  %s5 = scalar_select 0, %s4, %s2
  // Predicated region
  $region2: #{tpu_custom_call.1} parent=0 // pred_check
    _
  $region3: #{tpu_custom_call.1} parent=0 // pred_check_branch
    %7 = sbr.rel (0) target = $region5
  $region4: #{tpu_custom_call.1} parent=0 // pred_region
    _
  $region5: #{tpu_custom_call.1} parent=0 // pred_fallthru
    _
  %v8 = vld [vmem:[%s0] sm:$0x3f]
  %v9 = vld [vmem:[%s0 + $0x8] sm:$0x3f]
  %v10 = vld [vmem:[%s0 + $0x10] sm:$0x3f]
  %v11 = vld [vmem:[%s0 + $0x18] sm:$0x3f]
  %v12 = vld [vmem:[%s0 + $0x20] sm:$0x3f]
  %v13 = vld [vmem:[%s0 + $0x28] sm:$0x3f]
  %v14 = vld [vmem:[%s0 + $0x30] sm:$0x3f]
  %v15 = vld [vmem:[%s0 + $0x38] sm:$0x3f]
  %v16 = vtanh.pop %v8
  %v17 = vtanh.pop %v9
  %v18 = vtanh.pop %v10
  %v19 = vtanh.pop %v11
  %v20 = vtanh.pop %v12
  %v21 = vtanh.pop %v13
  %v22 = vtanh.pop %v14
  %v23 = vtanh.pop %v15
  %24 = vst [vmem:[%s1] sm:$0x3f] %v16
  %25 = vst [vmem:[%s1 + $0x8] sm:$0x3f] %v17
  %26 = vst [vmem:[%s1 + $0x10] sm:$0x3f] %v18
  %27 = vst [vmem:[%s1 + $0x18] sm:$0x3f] %v19
  %28 = vst [vmem:[%s1 + $0x20] sm:$0x3f] %v20
  %29 = vst [vmem:[%s1 + $0x28] sm:$0x3f] %v21
  %30 = vst [vmem:[%s1 + $0x30] sm:$0x3f] %v22
  %31 = vst [vmem:[%s1 + $0x38] sm:$0x3f] %v23
  // Predicated region
  $region6: #{tpu_custom_call.1} parent=0 // pred_check
    _
  $region7: #{tpu_custom_call.1} parent=0 // pred_check_branch
    %33 = sbr.rel (0) target = $region9
  $region8: #{tpu_custom_call.1} parent=0 // pred_region
    _
  $region9: #{tpu_custom_call.1} parent=0 // pred_fallthru
    _
  // Predicated region
  $region10: #{tpu_custom_call.1} parent=0 // pred_check
    _
  $region11: #{tpu_custom_call.1} parent=0 // pred_check_branch
    %35 = sbr.rel (0) target = $region13
  $region12: #{tpu_custom_call.1} parent=0 // pred_region
    _
  $region13: #{tpu_custom_call.1} parent=0 // pred_fallthru
    _

</llo_original>
